<compile_context>
chip_gen: v7x
topology: tpu7x:2x2x1
jax: 0.10.0
libtpu: 0.0.40
codegen_flags: <defaults>
</compile_context>

<pallas_src>
import functools

import jax
import jax.numpy as jnp
from jax.experimental import pallas as pl
from jax.experimental.pallas import tpu as pltpu


def _round_up(x: int, m: int) -> int:
    return ((x + m - 1) // m) * m


def _fused_mlp_kernel(*refs, n_layers: int, out_pdims: tuple):
    # refs layout: x_ref, w0, w1, ..., w_{L-1}, b_packed_ref, o_ref
    x_ref = refs[0]
    b_ref = refs[-2]
    o_ref = refs[-1]

    h = x_ref[...]                       # keep the compute dtype (no f32 upcast)
    compute_dtype = h.dtype
    for i in range(n_layers):            # static Python loop -> fully unrolled
        w = refs[1 + i][...]
        # MXU matmul in the compute dtype, f32 accumulation.
        acc = jnp.dot(h, w, preferred_element_type=jnp.float32)
        acc = acc + b_ref[i:i + 1, : out_pdims[i]].astype(jnp.float32)
        if i < n_layers - 1:             # activation between hidden layers only
            acc = jnp.maximum(acc, 0.0)  # ReLU
            h = acc.astype(compute_dtype)
        else:
            h = acc
    o_ref[...] = h.astype(o_ref.dtype)


def init_mlp_params(key, layer_dims, dtype=jnp.float32):
    """Parameters mirroring nn.Linear init; weight stored transposed as (in, out)."""
    params = []
    for i in range(len(layer_dims) - 1):
        d_in, d_out = layer_dims[i], layer_dims[i + 1]
        key, wk, bk = jax.random.split(key, 3)
        bound = 1.0 / (d_in ** 0.5)
        w = jax.random.uniform(wk, (d_in, d_out), dtype, -bound, bound)
        b = jax.random.uniform(bk, (d_out,), dtype, -bound, bound)
        params.append((w, b))
    return params


def _vmem_cap_bytes() -> int:
    """~75% of physical VMEM (generation-aware); conservative fallback."""
    try:
        return int(0.75 * pltpu.get_tpu_info().vmem_capacity_bytes)
    except Exception:
        return 48 << 20  # safe below v7x's 64 MiB physical VMEM


def mlp_decoder_forward(x, params, *, tile_batch: int = 512):
    """MLPDecoder.forward fused into one Pallas call.

    x: (batch, layer_dims[0]); params: list of (W (in,out), b (out,)).
    Returns (batch, layer_dims[-1]).
    """
    batch, d_in = x.shape
    n_layers = len(params)
    dims = [d_in] + [w.shape[1] for w, _ in params]

    itemsize = jnp.dtype(x.dtype).itemsize
    sublane = max(8, 32 // max(itemsize, 1))      # 8 f32, 16 bf16, 32 int8/fp8

    # Input feature dim stays at its true width; every layer OUTPUT dim is
    # padded to a lane-dense multiple of 128 (unmasked vst, full MXU N-tiles).
    pdims = [d_in] + [_round_up(d, 128) for d in dims[1:]]

    # Batch tiling: no batch padding; ragged tail handled by the cdiv grid
    # (out-of-range rows are never written back).
    if batch <= tile_batch:
        tb = batch                                # full-extent block: always legal
    else:
        tb = _round_up(min(tile_batch, batch), sublane)
    grid = (pl.cdiv(batch, tb),)

    # Zero-pad weights (input dim of layer 0 untouched); pack all biases into a
    # single (n_layers, max_out) array -> one BlockSpec, one DMA descriptor.
    padded_ws = []
    for i, (w, _) in enumerate(params):
        wi = (jnp.zeros((pdims[i], pdims[i + 1]), w.dtype)
              .at[: dims[i], : dims[i + 1]].set(w))
        padded_ws.append(wi)
    max_out = max(pdims[1:])
    b_dtype = params[0][1].dtype
    b_packed = jnp.zeros((n_layers, max_out), b_dtype)
    for i, (_, b) in enumerate(params):
        b_packed = b_packed.at[i, : dims[i + 1]].set(b)

    def build_in_specs(single_buffer: bool):
        kw = {"pipeline_mode": pl.Buffered(1)} if single_buffer else {}
        specs = [pl.BlockSpec((tb, pdims[0]), lambda g: (g, 0))]
        for wi in padded_ws:                       # grid-invariant, VMEM-resident
            specs.append(pl.BlockSpec(wi.shape, lambda g: (0, 0), **kw))
        specs.append(pl.BlockSpec(b_packed.shape, lambda g: (0, 0), **kw))
        return specs

    out_spec = pl.BlockSpec((tb, pdims[-1]), lambda g: (g, 0))

    # VMEM budget: resident weights (+bias), double-buffered x/out tiles, and
    # the widest live f32 intermediate (plus its consumer) + slack.
    weight_bytes = (sum(wi.size for wi in padded_ws) * itemsize
                    + b_packed.size * jnp.dtype(b_dtype).itemsize)
    io_bytes = 2 * tb * (pdims[0] + pdims[-1]) * itemsize
    interm_bytes = 2 * tb * max(pdims) * 4
    slack = 4 << 20

    flops = 2 * batch * sum(pdims[i] * pdims[i + 1] for i in range(n_layers))
    bytes_accessed = (x.size * itemsize + weight_bytes
                      + batch * pdims[-1] * itemsize)

    kernel = functools.partial(_fused_mlp_kernel, n_layers=n_layers,
                               out_pdims=tuple(pdims[1:]))

    def run(single_buffer: bool):
        wb = weight_bytes if single_buffer else 2 * weight_bytes
        vmem_limit = int(min(max(wb + io_bytes + interm_bytes + slack, 16 << 20),
                             _vmem_cap_bytes()))
        return pl.pallas_call(
            kernel,
            out_shape=jax.ShapeDtypeStruct((batch, pdims[-1]), x.dtype),
            grid_spec=pltpu.PrefetchScalarGridSpec(
                num_scalar_prefetch=0,
                grid=grid,
                in_specs=build_in_specs(single_buffer),
                out_specs=out_spec,
            ),
            compiler_params=pltpu.CompilerParams(
                dimension_semantics=("parallel",),
                vmem_limit_bytes=vmem_limit,
            ),
            cost_estimate=pl.CostEstimate(
                flops=flops, transcendentals=0, bytes_accessed=bytes_accessed),
        )(x, *padded_ws, b_packed)

    try:
        out_padded = run(single_buffer=True)       # preferred: 1x resident weights
    except Exception:
        out_padded = run(single_buffer=False)      # robust fallback (default buffering)

    return out_padded[:, : dims[-1]]


if __name__ == "__main__":
    # Decoder-style shapes: latent 16 -> 32 -> 64, batch=8.
    layer_dims = [16, 32, 64]
    batch = 8

    key = jax.random.PRNGKey(0)
    key, xk = jax.random.split(key)
    x = jax.random.normal(xk, (batch, layer_dims[0]), jnp.float32)

    params = init_mlp_params(key, layer_dims)

    out = mlp_decoder_forward(x, params)
    out = jax.block_until_ready(out)

    # Reference: plain JAX, same math as torch MLPDecoder (Linear + ReLU between
    # all but the last layer).
    ref = x
    for i, (w, b) in enumerate(params):
        ref = ref @ w + b
        if i < len(params) - 1:
            ref = jnp.maximum(ref, 0.0)

    assert out.shape == (batch, layer_dims[-1])
    assert jnp.allclose(out, ref, atol=1e-5, rtol=1e-5)

    print("KERNEL_OK")
</pallas_src>

<mosaic_0001>
module attributes {stable_mosaic.version = 11 : i64} {
  func.func @_fused_mlp_kernel(%arg0: i32, %arg1: memref<8x16xf32, #tpu.memory_space<vmem>>, %arg2: memref<16x128xf32, #tpu.memory_space<vmem>>, %arg3: memref<128x128xf32, #tpu.memory_space<vmem>>, %arg4: memref<2x128xf32, #tpu.memory_space<vmem>>, %arg5: memref<8x128xf32, #tpu.memory_space<vmem>>) attributes {dimension_semantics = [#tpu.dimension_semantics<parallel>], iteration_bounds = array<i64: 1>, scalar_prefetch = 0 : i64, scratch_operands = 0 : i64, tpu.core_type = #tpu.core_type<tc>, window_params = [{transform_indices = @transform_0, window_bounds = array<i64: 8, 16>}, {pipeline_mode = #tpu.pipeline_mode<synchronous>, transform_indices = @transform_1, window_bounds = array<i64: 16, 128>}, {pipeline_mode = #tpu.pipeline_mode<synchronous>, transform_indices = @transform_2, window_bounds = array<i64: 128, 128>}, {pipeline_mode = #tpu.pipeline_mode<synchronous>, transform_indices = @transform_3, window_bounds = array<i64: 2, 128>}, {transform_indices = @transform_4, window_bounds = array<i64: 8, 128>}]} {
    %c0 = arith.constant 0 : index
    %c0_0 = arith.constant 0 : index
    %0 = vector.load %arg1[%c0, %c0_0] : memref<8x16xf32, #tpu.memory_space<vmem>>, vector<8x16xf32>
    %c0_1 = arith.constant 0 : index
    %c0_2 = arith.constant 0 : index
    %1 = vector.load %arg2[%c0_1, %c0_2] : memref<16x128xf32, #tpu.memory_space<vmem>>, vector<16x128xf32>
    %cst = arith.constant dense<0.000000e+00> : vector<8x128xf32>
    %2 = tpu.matmul %0, %1, %cst {dimension_numbers = #tpu.dot_dimension_numbers<[1], [0], [0], [1], [0, 0, 1, 1], [], []>} : vector<8x16xf32>, vector<16x128xf32>, vector<8x128xf32> -> vector<8x128xf32>
    %c0_3 = arith.constant 0 : index
    %c0_4 = arith.constant 0 : index
    %3 = vector.load %arg4[%c0_3, %c0_4] : memref<2x128xf32, #tpu.memory_space<vmem>>, vector<1x128xf32>
    %4 = vector.broadcast %3 : vector<1x128xf32> to vector<8x128xf32>
    %5 = arith.addf %2, %4 : vector<8x128xf32>
    %cst_5 = arith.constant 0.000000e+00 : f32
    %6 = vector.broadcast %cst_5 : f32 to vector<8x128xf32>
    %7 = arith.maximumf %5, %6 : vector<8x128xf32>
    %c0_6 = arith.constant 0 : index
    %c0_7 = arith.constant 0 : index
    %8 = vector.load %arg3[%c0_6, %c0_7] : memref<128x128xf32, #tpu.memory_space<vmem>>, vector<128x128xf32>
    %cst_8 = arith.constant dense<0.000000e+00> : vector<8x128xf32>
    %9 = tpu.matmul %7, %8, %cst_8 {dimension_numbers = #tpu.dot_dimension_numbers<[1], [0], [0], [1], [0, 0, 1, 1], [], []>} : vector<8x128xf32>, vector<128x128xf32>, vector<8x128xf32> -> vector<8x128xf32>
    %c1 = arith.constant 1 : index
    %c0_9 = arith.constant 0 : index
    %10 = vector.load %arg4[%c1, %c0_9] : memref<2x128xf32, #tpu.memory_space<vmem>>, vector<1x128xf32>
    %11 = vector.broadcast %10 : vector<1x128xf32> to vector<8x128xf32>
    %12 = arith.addf %9, %11 : vector<8x128xf32>
    %c0_10 = arith.constant 0 : index
    %c0_11 = arith.constant 0 : index
    %13 = vector.load %arg5[%c0_10, %c0_11] : memref<8x128xf32, #tpu.memory_space<vmem>>, vector<8x128xf32>
    tpu.vector_store %arg5[%c0_10, %c0_11], %12 {strides = array<i32>} : memref<8x128xf32, #tpu.memory_space<vmem>>, vector<8x128xf32>,
    return
  }
  func.func @transform_0(%arg0: i32) -> (i32, i32) {
    %c0_i32 = arith.constant 0 : i32
    %c0_i32_0 = arith.constant 0 : i32
    return %arg0, %c0_i32 : i32, i32
  }
  func.func @transform_1(%arg0: i32) -> (i32, i32) {
    %c0_i32 = arith.constant 0 : i32
    %c0_i32_0 = arith.constant 0 : i32
    %c0_i32_1 = arith.constant 0 : i32
    return %c0_i32, %c0_i32_0 : i32, i32
  }
  func.func @transform_2(%arg0: i32) -> (i32, i32) {
    %c0_i32 = arith.constant 0 : i32
    %c0_i32_0 = arith.constant 0 : i32
    %c0_i32_1 = arith.constant 0 : i32
    return %c0_i32, %c0_i32_0 : i32, i32
  }
  func.func @transform_3(%arg0: i32) -> (i32, i32) {
    %c0_i32 = arith.constant 0 : i32
    %c0_i32_0 = arith.constant 0 : i32
    %c0_i32_1 = arith.constant 0 : i32
    return %c0_i32, %c0_i32_0 : i32, i32
  }
  func.func @transform_4(%arg0: i32) -> (i32, i32) {
    %c0_i32 = arith.constant 0 : i32
    %c0_i32_0 = arith.constant 0 : i32
    return %arg0, %c0_i32 : i32, i32
  }
}

module attributes {stable_mosaic.version = 11 : i64} {
  func.func @_fused_mlp_kernel(%arg0: i32, %arg1: memref<8x16xf32, #tpu.memory_space<vmem>>, %arg2: memref<16x128xf32, #tpu.memory_space<vmem>>, %arg3: memref<128x128xf32, #tpu.memory_space<vmem>>, %arg4: memref<2x128xf32, #tpu.memory_space<vmem>>, %arg5: memref<8x128xf32, #tpu.memory_space<vmem>>) attributes {dimension_semantics = [#tpu.dimension_semantics<parallel>], iteration_bounds = array<i64: 1>, scalar_prefetch = 0 : i64, scratch_operands = 0 : i64, tpu.core_type = #tpu.core_type<tc>, window_params = [{transform_indices = @transform_0, window_bounds = array<i64: 8, 16>}, {pipeline_mode = #tpu.pipeline_mode<synchronous>, transform_indices = @transform_1, window_bounds = array<i64: 16, 128>}, {pipeline_mode = #tpu.pipeline_mode<synchronous>, transform_indices = @transform_2, window_bounds = array<i64: 128, 128>}, {pipeline_mode = #tpu.pipeline_mode<synchronous>, transform_indices = @transform_3, window_bounds = array<i64: 2, 128>}, {transform_indices = @transform_4, window_bounds = array<i64: 8, 128>}]} {
    %c0 = arith.constant 0 : index
    %c0_0 = arith.constant 0 : index
    %0 = vector.load %arg1[%c0, %c0_0] : memref<8x16xf32, #tpu.memory_space<vmem>>, vector<8x16xf32>
    %c0_1 = arith.constant 0 : index
    %c0_2 = arith.constant 0 : index
    %1 = vector.load %arg2[%c0_1, %c0_2] : memref<16x128xf32, #tpu.memory_space<vmem>>, vector<16x128xf32>
    %cst = arith.constant dense<0.000000e+00> : vector<8x128xf32>
    %2 = tpu.matmul %0, %1, %cst {dimension_numbers = #tpu.dot_dimension_numbers<[1], [0], [0], [1], [0, 0, 1, 1], [], []>} : vector<8x16xf32>, vector<16x128xf32>, vector<8x128xf32> -> vector<8x128xf32>
    %c0_3 = arith.constant 0 : index
    %c0_4 = arith.constant 0 : index
    %3 = vector.load %arg4[%c0_3, %c0_4] : memref<2x128xf32, #tpu.memory_space<vmem>>, vector<1x128xf32>
    %4 = vector.broadcast %3 : vector<1x128xf32> to vector<8x128xf32>
    %5 = arith.addf %2, %4 : vector<8x128xf32>
    %cst_5 = arith.constant 0.000000e+00 : f32
    %6 = vector.broadcast %cst_5 : f32 to vector<8x128xf32>
    %7 = arith.maximumf %5, %6 : vector<8x128xf32>
    %c0_6 = arith.constant 0 : index
    %c0_7 = arith.constant 0 : index
    %8 = vector.load %arg3[%c0_6, %c0_7] : memref<128x128xf32, #tpu.memory_space<vmem>>, vector<128x128xf32>
    %cst_8 = arith.constant dense<0.000000e+00> : vector<8x128xf32>
    %9 = tpu.matmul %7, %8, %cst_8 {dimension_numbers = #tpu.dot_dimension_numbers<[1], [0], [0], [1], [0, 0, 1, 1], [], []>} : vector<8x128xf32>, vector<128x128xf32>, vector<8x128xf32> -> vector<8x128xf32>
    %c1 = arith.constant 1 : index
    %c0_9 = arith.constant 0 : index
    %10 = vector.load %arg4[%c1, %c0_9] : memref<2x128xf32, #tpu.memory_space<vmem>>, vector<1x128xf32>
    %11 = vector.broadcast %10 : vector<1x128xf32> to vector<8x128xf32>
    %12 = arith.addf %9, %11 : vector<8x128xf32>
    %c0_10 = arith.constant 0 : index
    %c0_11 = arith.constant 0 : index
    %13 = vector.load %arg5[%c0_10, %c0_11] : memref<8x128xf32, #tpu.memory_space<vmem>>, vector<8x128xf32>
    tpu.vector_store %arg5[%c0_10, %c0_11], %12 {strides = array<i32>} : memref<8x128xf32, #tpu.memory_space<vmem>>, vector<8x128xf32>,
    return
  }
  func.func @transform_0(%arg0: i32) -> (i32, i32) {
    %c0_i32 = arith.constant 0 : i32
    %c0_i32_0 = arith.constant 0 : i32
    return %arg0, %c0_i32 : i32, i32
  }
  func.func @transform_1(%arg0: i32) -> (i32, i32) {
    %c0_i32 = arith.constant 0 : i32
    %c0_i32_0 = arith.constant 0 : i32
    %c0_i32_1 = arith.constant 0 : i32
    return %c0_i32, %c0_i32_0 : i32, i32
  }
  func.func @transform_2(%arg0: i32) -> (i32, i32) {
    %c0_i32 = arith.constant 0 : i32
    %c0_i32_0 = arith.constant 0 : i32
    %c0_i32_1 = arith.constant 0 : i32
    return %c0_i32, %c0_i32_0 : i32, i32
  }
  func.func @transform_3(%arg0: i32) -> (i32, i32) {
    %c0_i32 = arith.constant 0 : i32
    %c0_i32_0 = arith.constant 0 : i32
    %c0_i32_1 = arith.constant 0 : i32
    return %c0_i32, %c0_i32_0 : i32, i32
  }
  func.func @transform_4(%arg0: i32) -> (i32, i32) {
    %c0_i32 = arith.constant 0 : i32
    %c0_i32_0 = arith.constant 0 : i32
    return %arg0, %c0_i32 : i32, i32
  }
}

</mosaic_0001>

<llo_original>
// kernel: tpu_custom_call.1
$region0: #{tpu_custom_call.1}
  #allocation0 [shape = 'u32[]', space=smem, size = 0x4, offset = 0x4, fixed_abs, tag = 'smem constant byte address 0x4 - core index']
  #allocation1 [shape = 'u32[144,128]{1,0:T(1,128)}', space=vmem, size = 0x12000, scoped, tag = 'internal scratch']
  %s0 = inlined_call_operand.hbm [shape: f32[8,16], index: 0, kind: input, shape index: {}]
  %s1 = inlined_call_operand.hbm [shape: f32[16,128], index: 1, kind: input, shape index: {}]
  %s2 = inlined_call_operand.hbm [shape: f32[128,128], index: 2, kind: input, shape index: {}]
  %s3 = inlined_call_operand.vmem [shape: f32[2,128], index: 3, kind: input, shape index: {}]
  %s4 = inlined_call_operand.hbm [shape: f32[8,128], index: 4, kind: output, shape index: {}]
  %s5 = sld [smem:[#allocation0]]
  $region38: #{tpu_custom_call.1} parent=0
    _
  %s7 = ssub.s32 1, %s5
  %s8 = scalar_select 0, %s7, %s5
  $region1: #{tpu_custom_call.1} parent=0
    #allocation2 [shape = 'u8[4096]{0}', space=vmem, size = 0x1000, scoped, tag = 'input window, operand 0, single buffered']
    #allocation3 [shape = 's32[1]{0}', space=sflag, size = 0x4, scoped, tag = 'scoped memory for tpu_custom_call.1']
    #allocation4 [shape = 's32[1]{0}', space=sflag, size = 0x4, scoped, tag = 'scoped memory for tpu_custom_call.1']
    #allocation5 [shape = 'u8[8192]{0}', space=vmem, size = 0x2000, scoped, tag = 'input window, operand 1, single buffered']
    #allocation6 [shape = 's32[1]{0}', space=sflag, size = 0x4, scoped, tag = 'scoped memory for tpu_custom_call.1']
    #allocation7 [shape = 'u8[65536]{0}', space=vmem, size = 0x10000, scoped, tag = 'input window, operand 2, single buffered']
    #allocation8 [shape = 'u8[4096]{0}', space=vmem, size = 0x1000, scoped, tag = 'output window, operand 0, single buffered']
    %9 = vsyncpa [#allocation3], 0
    %10 = vsyncpa [#allocation6], 0
    %11 = vsyncpa [#allocation4], 0
    // Predicated region
    $region2: #{tpu_custom_call.1} parent=1 // pred_check
      _
    $region3: #{tpu_custom_call.1} parent=1 // pred_check_branch
      %13 = sbr.rel (0) target = $region5
    $region4: #{tpu_custom_call.1} parent=1 // pred_region
      %s15 = ssub.s32 128, 128
      %16 = vsyncadd [#allocation3], %s15
      %s18 = sshll.u32 [#allocation2], 4
      %s19 = int_to_ptr.vmem [resolvable:$true] %s18
      %21 = dma.hbm_to_vmem [thread:$0]  %s0, 128, %s19, [#allocation3]
    $region5: #{tpu_custom_call.1} parent=1 // pred_fallthru
      _
    // Predicated region
    $region6: #{tpu_custom_call.1} parent=1 // pred_check
      _
    $region7: #{tpu_custom_call.1} parent=1 // pred_check_branch
      %23 = sbr.rel (0) target = $region9
    $region8: #{tpu_custom_call.1} parent=1 // pred_region
      %s25 = ssub.s32 256, 256
      %26 = vsyncadd [#allocation6], %s25
      %s27 = sshll.u32 [#allocation5], 4
      %s28 = int_to_ptr.vmem [resolvable:$true] %s27
      %33 = dma.hbm_to_vmem [thread:$0]  %s1, 256, %s28, [#allocation6], 128, 128, 8
    $region9: #{tpu_custom_call.1} parent=1 // pred_fallthru
      _
    // Predicated region
    $region10: #{tpu_custom_call.1} parent=1 // pred_check
      _
    $region11: #{tpu_custom_call.1} parent=1 // pred_check_branch
      %35 = sbr.rel (0) target = $region13
    $region12: #{tpu_custom_call.1} parent=1 // pred_region
      %s37 = ssub.s32 2048, 2048
      %38 = vsyncadd [#allocation6], %s37
      %s39 = sshll.u32 [#allocation7], 4
      %s40 = int_to_ptr.vmem [resolvable:$true] %s39
      %45 = dma.hbm_to_vmem [thread:$0]  %s2, 2048, %s40, [#allocation6], 128, 128, 8
    $region13: #{tpu_custom_call.1} parent=1 // pred_fallthru
      _
    // Predicated region
    $region14: #{tpu_custom_call.1} parent=1 // pred_check
      _
    $region15: #{tpu_custom_call.1} parent=1 // pred_check_branch
      %47 = sbr.rel (0) target = $region17
    $region16: #{tpu_custom_call.1} parent=1 // pred_region
      _
    $region17: #{tpu_custom_call.1} parent=1 // pred_fallthru
      _
    // Predicated region
    $region18: #{tpu_custom_call.1} parent=1 // pred_check
      _
    $region19: #{tpu_custom_call.1} parent=1 // pred_check_branch
      %49 = sbr.rel (0) target = $region21
    $region20: #{tpu_custom_call.1} parent=1 // pred_region
      %50 = dma.done [#allocation3], 128
    $region21: #{tpu_custom_call.1} parent=1 // pred_fallthru
      _
    // Predicated region
    $region22: #{tpu_custom_call.1} parent=1 // pred_check
      _
    $region23: #{tpu_custom_call.1} parent=1 // pred_check_branch
      %52 = sbr.rel (0) target = $region25
    $region24: #{tpu_custom_call.1} parent=1 // pred_region
      %53 = dma.done [#allocation6], 256
    $region25: #{tpu_custom_call.1} parent=1 // pred_fallthru
      _
    // Predicated region
    $region26: #{tpu_custom_call.1} parent=1 // pred_check
      _
    $region27: #{tpu_custom_call.1} parent=1 // pred_check_branch
      %55 = sbr.rel (0) target = $region29
    $region28: #{tpu_custom_call.1} parent=1 // pred_region
      %56 = dma.done [#allocation6], 2048
    $region29: #{tpu_custom_call.1} parent=1 // pred_fallthru
      _
    %v57 = vld [vmem:[#allocation2] sm:$0xff]
    %v58 = vld [vmem:[#allocation5] sm:$0xff]
    %v59 = vld [vmem:[#allocation5 + $0x8] sm:$0xff]
    %v60 = vld [vmem:[%s3] sm:$0x1]
    %v61 = vlaneseq
    %v62 = vshrl.u32 %v61, 7
    %v63 = vsub.s32 0, %v62
    %v64 = vrot.slane %v60, %v63
    %vm65 = vcmask 130048
    %v67 = vsel %vm65, %v57, 0
    %69 = vmatprep.subr.mxu0 0.0
    %70 = vmatpush1.msra.mxu0 %v58
    %71 = vmatprep.subr.mxu0 0.0
    %72 = vmatpush1.msra.mxu0 %v59
    %73 = vmatprep.subr.mxu0 0.0
    %74 = vmatpush1.msra.mxu0 0.0
    %75 = vmatprep.subr.mxu0 0.0
    %76 = vmatpush1.msra.mxu0 0.0
    %77 = vmatprep.subr.mxu0 0.0
    %78 = vmatpush1.msra.mxu0 0.0
    %79 = vmatprep.subr.mxu0 0.0
    %80 = vmatpush1.msra.mxu0 0.0
    %81 = vmatprep.subr.mxu0 0.0
    %82 = vmatpush1.msra.mxu0 0.0
    %83 = vmatprep.subr.mxu0 0.0
    %84 = vmatpush1.msra.mxu0 0.0
    %85 = vmatprep.subr.mxu0 0.0
    %86 = vmatpush1.msra.mxu0 0.0
    %87 = vmatprep.subr.mxu0 0.0
    %88 = vmatpush1.msra.mxu0 0.0
    %89 = vmatprep.subr.mxu0 0.0
    %90 = vmatpush1.msra.mxu0 0.0
    %91 = vmatprep.subr.mxu0 0.0
    %92 = vmatpush1.msra.mxu0 0.0
    %93 = vmatprep.subr.mxu0 0.0
    %94 = vmatpush1.msra.mxu0 0.0
    %95 = vmatprep.subr.mxu0 0.0
    %96 = vmatpush1.msra.mxu0 0.0
    %97 = vmatprep.subr.mxu0 0.0
    %98 = vmatpush1.msra.mxu0 0.0
    %99 = vmatprep.subr.mxu0 0.0
    %100 = vmatpush1.msra.mxu0 0.0
    %101 = vmatprep.subr.mxu0 0.0
    %102 = vmatpush1.msra.mxu0 0.0
    %103 = vmatprep.subr.mxu0 0.0
    %104 = vmatpush1.msra.mxu0 0.0
    %105 = vmatprep.subr.mxu0 0.0
    %106 = vmatpush1.msra.mxu0 0.0
    %107 = vmatprep.subr.mxu0 0.0
    %108 = vmatpush1.msra.mxu0 0.0
    %109 = vmatprep.subr.mxu0 0.0
    %110 = vmatpush1.msra.mxu0 0.0
    %111 = vmatprep.subr.mxu0 0.0
    %112 = vmatpush1.msra.mxu0 0.0
    %113 = vmatprep.subr.mxu0 0.0
    %114 = vmatpush1.msra.mxu0 0.0
    %115 = vmatprep.subr.mxu0 0.0
    %116 = vmatpush1.msra.mxu0 0.0
    %117 = vmatprep.subr.mxu0 0.0
    %118 = vmatpush1.msra.mxu0 0.0
    %119 = vmatprep.subr.mxu0 0.0
    %120 = vmatpush1.msra.mxu0 0.0
    %121 = vmatprep.subr.mxu0 0.0
    %122 = vmatpush1.msra.mxu0 0.0
    %123 = vmatprep.subr.mxu0 0.0
    %124 = vmatpush1.msra.mxu0 0.0
    %125 = vmatprep.subr.mxu0 0.0
    %126 = vmatpush1.msra.mxu0 0.0
    %127 = vmatprep.subr.mxu0 0.0
    %128 = vmatpush1.msra.mxu0 0.0
    %129 = vmatprep.subr.mxu0 0.0
    %130 = vmatpush1.msra.mxu0 0.0
    %131 = vmatprep.subr.mxu0 0.0
    %132 = vmatpush1.msra.mxu0 0.0
    %133 = vmatprep.mubr.f32.mxu0 0.0
    %134 = vmatmul.mubr.f32.gmra.mrb[0].mxu0 %v67
    %v135 = vpop.f32.mrb[0].mxu0
    %v136 = vadd.f32 %v64, %v135
    %v137 = vpop.f32.mrb[0].mxu0
    %138 = vdwg.mxu0
    %v139 = vmax.f32 %v136, 0.0
    %v140 = vld [vmem:[#allocation7] sm:$0xff]
    %v141 = vld [vmem:[#allocation7 + $0x8] sm:$0xff]
    %v142 = vld [vmem:[#allocation7 + $0x10] sm:$0xff]
    %v143 = vld [vmem:[#allocation7 + $0x18] sm:$0xff]
    %v144 = vld [vmem:[#allocation7 + $0x20] sm:$0xff]
    %v145 = vld [vmem:[#allocation7 + $0x28] sm:$0xff]
    %v146 = vld [vmem:[#allocation7 + $0x30] sm:$0xff]
    %v147 = vld [vmem:[#allocation7 + $0x38] sm:$0xff]
    %v148 = vld [vmem:[#allocation7 + $0x40] sm:$0xff]
    %v149 = vld [vmem:[#allocation7 + $0x48] sm:$0xff]
    %v150 = vld [vmem:[#allocation7 + $0x50] sm:$0xff]
    %v151 = vld [vmem:[#allocation7 + $0x58] sm:$0xff]
    %v152 = vld [vmem:[#allocation7 + $0x60] sm:$0xff]
    %v153 = vld [vmem:[#allocation7 + $0x68] sm:$0xff]
    %v154 = vld [vmem:[#allocation7 + $0x70] sm:$0xff]
    %v155 = vld [vmem:[#allocation7 + $0x78] sm:$0xff]
    %v156 = vld [vmem:[%s3 + $0x1] sm:$0x1]
    %v157 = vlaneseq
    %v158 = vshrl.u32 %v157, 7
    %v159 = vsub.s32 0, %v158
    %v160 = vrot.slane %v156, %v159
    %161 = vmatprep.subr.mxu0 0.0
    %162 = vmatpush1.msra.mxu0 %v140
    %163 = vmatprep.subr.mxu0 0.0
    %164 = vmatpush1.msra.mxu0 %v141
    %165 = vmatprep.subr.mxu0 0.0
    %166 = vmatpush1.msra.mxu0 %v142
    %167 = vmatprep.subr.mxu0 0.0
    %168 = vmatpush1.msra.mxu0 %v143
    %169 = vmatprep.subr.mxu0 0.0
    %170 = vmatpush1.msra.mxu0 %v144
    %171 = vmatprep.subr.mxu0 0.0
    %172 = vmatpush1.msra.mxu0 %v145
    %173 = vmatprep.subr.mxu0 0.0
    %174 = vmatpush1.msra.mxu0 %v146
    %175 = vmatprep.subr.mxu0 0.0
    %176 = vmatpush1.msra.mxu0 %v147
    %177 = vmatprep.subr.mxu0 0.0
    %178 = vmatpush1.msra.mxu0 %v148
    %179 = vmatprep.subr.mxu0 0.0
    %180 = vmatpush1.msra.mxu0 %v149
    %181 = vmatprep.subr.mxu0 0.0
    %182 = vmatpush1.msra.mxu0 %v150
    %183 = vmatprep.subr.mxu0 0.0
    %184 = vmatpush1.msra.mxu0 %v151
    %185 = vmatprep.subr.mxu0 0.0
    %186 = vmatpush1.msra.mxu0 %v152
    %187 = vmatprep.subr.mxu0 0.0
    %188 = vmatpush1.msra.mxu0 %v153
    %189 = vmatprep.subr.mxu0 0.0
    %190 = vmatpush1.msra.mxu0 %v154
    %191 = vmatprep.subr.mxu0 0.0
    %192 = vmatpush1.msra.mxu0 %v155
    %193 = vmatprep.subr.mxu0 0.0
    %194 = vmatpush1.msra.mxu0 0.0
    %195 = vmatprep.subr.mxu0 0.0
    %196 = vmatpush1.msra.mxu0 0.0
    %197 = vmatprep.subr.mxu0 0.0
    %198 = vmatpush1.msra.mxu0 0.0
    %199 = vmatprep.subr.mxu0 0.0
    %200 = vmatpush1.msra.mxu0 0.0
    %201 = vmatprep.subr.mxu0 0.0
    %202 = vmatpush1.msra.mxu0 0.0
    %203 = vmatprep.subr.mxu0 0.0
    %204 = vmatpush1.msra.mxu0 0.0
    %205 = vmatprep.subr.mxu0 0.0
    %206 = vmatpush1.msra.mxu0 0.0
    %207 = vmatprep.subr.mxu0 0.0
    %208 = vmatpush1.msra.mxu0 0.0
    %209 = vmatprep.subr.mxu0 0.0
    %210 = vmatpush1.msra.mxu0 0.0
    %211 = vmatprep.subr.mxu0 0.0
    %212 = vmatpush1.msra.mxu0 0.0
    %213 = vmatprep.subr.mxu0 0.0
    %214 = vmatpush1.msra.mxu0 0.0
    %215 = vmatprep.subr.mxu0 0.0
    %216 = vmatpush1.msra.mxu0 0.0
    %217 = vmatprep.subr.mxu0 0.0
    %218 = vmatpush1.msra.mxu0 0.0
    %219 = vmatprep.subr.mxu0 0.0
    %220 = vmatpush1.msra.mxu0 0.0
    %221 = vmatprep.subr.mxu0 0.0
    %222 = vmatpush1.msra.mxu0 0.0
    %223 = vmatprep.subr.mxu0 0.0
    %224 = vmatpush1.msra.mxu0 0.0
    %225 = vmatprep.mubr.f32.mxu0 0.0
    %226 = vmatmul.mubr.f32.gmra.mrb[0].mxu0 %v139
    %v227 = vpop.f32.mrb[0].mxu0
    %v228 = vadd.f32 %v160, %v227
    %v229 = vpop.f32.mrb[0].mxu0
    %230 = vdwg.mxu0
    %231 = vst [vmem:[#allocation8] sm:$0xff] %v228
    // Predicated region
    $region30: #{tpu_custom_call.1} parent=1 // pred_check
      _
    $region31: #{tpu_custom_call.1} parent=1 // pred_check_branch
      %233 = sbr.rel (0) target = $region33
    $region32: #{tpu_custom_call.1} parent=1 // pred_region
      %s235 = ssub.s32 128, 128
      %236 = vsyncadd [#allocation4], %s235
      %s238 = sshll.u32 [#allocation8], 4
      %s239 = int_to_ptr.vmem [resolvable:$true] %s238
      %241 = dma.vmem_to_hbm [thread:$0]  %s239, 128, %s4, [#allocation4]
    $region33: #{tpu_custom_call.1} parent=1 // pred_fallthru
      _
    // Predicated region
    $region34: #{tpu_custom_call.1} parent=1 // pred_check
      _
    $region35: #{tpu_custom_call.1} parent=1 // pred_check_branch
      %243 = sbr.rel (0) target = $region37
    $region36: #{tpu_custom_call.1} parent=1 // pred_region
      %244 = dma.done [#allocation4], 128
    $region37: #{tpu_custom_call.1} parent=1 // pred_fallthru
      _
    %245 = vsyncpa [#allocation3], 1
    %246 = vsyncpa [#allocation6], 1
    %247 = vsyncpa [#allocation4], 1

// kernel: tpu_custom_call.1
$region0: #{tpu_custom_call.1}
  #allocation0 [shape = 'u32[]', space=smem, size = 0x4, offset = 0x4, fixed_abs, tag = 'smem constant byte address 0x4 - core index']
  #allocation1 [shape = 'u32[144,128]{1,0:T(1,128)}', space=vmem, size = 0x12000, scoped, tag = 'internal scratch']
  %s0 = inlined_call_operand.hbm [shape: f32[8,16], index: 0, kind: input, shape index: {}]
  %s1 = inlined_call_operand.hbm [shape: f32[16,128], index: 1, kind: input, shape index: {}]
  %s2 = inlined_call_operand.hbm [shape: f32[128,128], index: 2, kind: input, shape index: {}]
  %s3 = inlined_call_operand.vmem [shape: f32[2,128], index: 3, kind: input, shape index: {}]
  %s4 = inlined_call_operand.hbm [shape: f32[8,128], index: 4, kind: output, shape index: {}]
  %s5 = sld [smem:[#allocation0]]
  $region38: #{tpu_custom_call.1} parent=0
    _
  %s7 = ssub.s32 1, %s5
  %s8 = scalar_select 0, %s7, %s5
  $region1: #{tpu_custom_call.1} parent=0
    #allocation2 [shape = 'u8[4096]{0}', space=vmem, size = 0x1000, scoped, tag = 'input window, operand 0, single buffered']
    #allocation3 [shape = 's32[1]{0}', space=sflag, size = 0x4, scoped, tag = 'scoped memory for tpu_custom_call.1']
    #allocation4 [shape = 's32[1]{0}', space=sflag, size = 0x4, scoped, tag = 'scoped memory for tpu_custom_call.1']
    #allocation5 [shape = 'u8[8192]{0}', space=vmem, size = 0x2000, scoped, tag = 'input window, operand 1, single buffered']
    #allocation6 [shape = 's32[1]{0}', space=sflag, size = 0x4, scoped, tag = 'scoped memory for tpu_custom_call.1']
    #allocation7 [shape = 'u8[65536]{0}', space=vmem, size = 0x10000, scoped, tag = 'input window, operand 2, single buffered']
    #allocation8 [shape = 'u8[4096]{0}', space=vmem, size = 0x1000, scoped, tag = 'output window, operand 0, single buffered']
    %9 = vsyncpa [#allocation3], 0
    %10 = vsyncpa [#allocation6], 0
    %11 = vsyncpa [#allocation4], 0
    // Predicated region
    $region2: #{tpu_custom_call.1} parent=1 // pred_check
      _
    $region3: #{tpu_custom_call.1} parent=1 // pred_check_branch
      %13 = sbr.rel (0) target = $region5
    $region4: #{tpu_custom_call.1} parent=1 // pred_region
      %s15 = ssub.s32 128, 128
      %16 = vsyncadd [#allocation3], %s15
      %s18 = sshll.u32 [#allocation2], 4
      %s19 = int_to_ptr.vmem [resolvable:$true] %s18
      %21 = dma.hbm_to_vmem [thread:$0]  %s0, 128, %s19, [#allocation3]
    $region5: #{tpu_custom_call.1} parent=1 // pred_fallthru
      _
    // Predicated region
    $region6: #{tpu_custom_call.1} parent=1 // pred_check
      _
    $region7: #{tpu_custom_call.1} parent=1 // pred_check_branch
      %23 = sbr.rel (0) target = $region9
    $region8: #{tpu_custom_call.1} parent=1 // pred_region
      %s25 = ssub.s32 256, 256
      %26 = vsyncadd [#allocation6], %s25
      %s27 = sshll.u32 [#allocation5], 4
      %s28 = int_to_ptr.vmem [resolvable:$true] %s27
      %33 = dma.hbm_to_vmem [thread:$0]  %s1, 256, %s28, [#allocation6], 128, 128, 8
    $region9: #{tpu_custom_call.1} parent=1 // pred_fallthru
      _
    // Predicated region
    $region10: #{tpu_custom_call.1} parent=1 // pred_check
      _
    $region11: #{tpu_custom_call.1} parent=1 // pred_check_branch
      %35 = sbr.rel (0) target = $region13
    $region12: #{tpu_custom_call.1} parent=1 // pred_region
      %s37 = ssub.s32 2048, 2048
      %38 = vsyncadd [#allocation6], %s37
      %s39 = sshll.u32 [#allocation7], 4
      %s40 = int_to_ptr.vmem [resolvable:$true] %s39
      %45 = dma.hbm_to_vmem [thread:$0]  %s2, 2048, %s40, [#allocation6], 128, 128, 8
    $region13: #{tpu_custom_call.1} parent=1 // pred_fallthru
      _
    // Predicated region
    $region14: #{tpu_custom_call.1} parent=1 // pred_check
      _
    $region15: #{tpu_custom_call.1} parent=1 // pred_check_branch
      %47 = sbr.rel (0) target = $region17
    $region16: #{tpu_custom_call.1} parent=1 // pred_region
      _
    $region17: #{tpu_custom_call.1} parent=1 // pred_fallthru
      _
    // Predicated region
    $region18: #{tpu_custom_call.1} parent=1 // pred_check
      _
    $region19: #{tpu_custom_call.1} parent=1 // pred_check_branch
      %49 = sbr.rel (0) target = $region21
    $region20: #{tpu_custom_call.1} parent=1 // pred_region
      %50 = dma.done [#allocation3], 128
    $region21: #{tpu_custom_call.1} parent=1 // pred_fallthru
      _
    // Predicated region
    $region22: #{tpu_custom_call.1} parent=1 // pred_check
      _
    $region23: #{tpu_custom_call.1} parent=1 // pred_check_branch
      %52 = sbr.rel (0) target = $region25
    $region24: #{tpu_custom_call.1} parent=1 // pred_region
      %53 = dma.done [#allocation6], 256
    $region25: #{tpu_custom_call.1} parent=1 // pred_fallthru
      _
    // Predicated region
    $region26: #{tpu_custom_call.1} parent=1 // pred_check
      _
    $region27: #{tpu_custom_call.1} parent=1 // pred_check_branch
      %55 = sbr.rel (0) target = $region29
    $region28: #{tpu_custom_call.1} parent=1 // pred_region
      %56 = dma.done [#allocation6], 2048
    $region29: #{tpu_custom_call.1} parent=1 // pred_fallthru
      _
    %v57 = vld [vmem:[#allocation2] sm:$0xff]
    %v58 = vld [vmem:[#allocation5] sm:$0xff]
    %v59 = vld [vmem:[#allocation5 + $0x8] sm:$0xff]
    %v60 = vld [vmem:[%s3] sm:$0x1]
    %v61 = vlaneseq
    %v62 = vshrl.u32 %v61, 7
    %v63 = vsub.s32 0, %v62
    %v64 = vrot.slane %v60, %v63
    %vm65 = vcmask 130048
    %v67 = vsel %vm65, %v57, 0
    %69 = vmatprep.subr.mxu0 0.0
    %70 = vmatpush1.msra.mxu0 %v58
    %71 = vmatprep.subr.mxu0 0.0
    %72 = vmatpush1.msra.mxu0 %v59
    %73 = vmatprep.subr.mxu0 0.0
    %74 = vmatpush1.msra.mxu0 0.0
    %75 = vmatprep.subr.mxu0 0.0
    %76 = vmatpush1.msra.mxu0 0.0
    %77 = vmatprep.subr.mxu0 0.0
    %78 = vmatpush1.msra.mxu0 0.0
    %79 = vmatprep.subr.mxu0 0.0
    %80 = vmatpush1.msra.mxu0 0.0
    %81 = vmatprep.subr.mxu0 0.0
    %82 = vmatpush1.msra.mxu0 0.0
    %83 = vmatprep.subr.mxu0 0.0
    %84 = vmatpush1.msra.mxu0 0.0
    %85 = vmatprep.subr.mxu0 0.0
    %86 = vmatpush1.msra.mxu0 0.0
    %87 = vmatprep.subr.mxu0 0.0
    %88 = vmatpush1.msra.mxu0 0.0
    %89 = vmatprep.subr.mxu0 0.0
    %90 = vmatpush1.msra.mxu0 0.0
    %91 = vmatprep.subr.mxu0 0.0
    %92 = vmatpush1.msra.mxu0 0.0
    %93 = vmatprep.subr.mxu0 0.0
    %94 = vmatpush1.msra.mxu0 0.0
    %95 = vmatprep.subr.mxu0 0.0
    %96 = vmatpush1.msra.mxu0 0.0
    %97 = vmatprep.subr.mxu0 0.0
    %98 = vmatpush1.msra.mxu0 0.0
    %99 = vmatprep.subr.mxu0 0.0
    %100 = vmatpush1.msra.mxu0 0.0
    %101 = vmatprep.subr.mxu0 0.0
    %102 = vmatpush1.msra.mxu0 0.0
    %103 = vmatprep.subr.mxu0 0.0
    %104 = vmatpush1.msra.mxu0 0.0
    %105 = vmatprep.subr.mxu0 0.0
    %106 = vmatpush1.msra.mxu0 0.0
    %107 = vmatprep.subr.mxu0 0.0
    %108 = vmatpush1.msra.mxu0 0.0
    %109 = vmatprep.subr.mxu0 0.0
    %110 = vmatpush1.msra.mxu0 0.0
    %111 = vmatprep.subr.mxu0 0.0
    %112 = vmatpush1.msra.mxu0 0.0
    %113 = vmatprep.subr.mxu0 0.0
    %114 = vmatpush1.msra.mxu0 0.0
    %115 = vmatprep.subr.mxu0 0.0
    %116 = vmatpush1.msra.mxu0 0.0
    %117 = vmatprep.subr.mxu0 0.0
    %118 = vmatpush1.msra.mxu0 0.0
    %119 = vmatprep.subr.mxu0 0.0
    %120 = vmatpush1.msra.mxu0 0.0
    %121 = vmatprep.subr.mxu0 0.0
    %122 = vmatpush1.msra.mxu0 0.0
    %123 = vmatprep.subr.mxu0 0.0
    %124 = vmatpush1.msra.mxu0 0.0
    %125 = vmatprep.subr.mxu0 0.0
    %126 = vmatpush1.msra.mxu0 0.0
    %127 = vmatprep.subr.mxu0 0.0
    %128 = vmatpush1.msra.mxu0 0.0
    %129 = vmatprep.subr.mxu0 0.0
    %130 = vmatpush1.msra.mxu0 0.0
    %131 = vmatprep.subr.mxu0 0.0
    %132 = vmatpush1.msra.mxu0 0.0
    %133 = vmatprep.mubr.f32.mxu0 0.0
    %134 = vmatmul.mubr.f32.gmra.mrb[0].mxu0 %v67
    %v135 = vpop.f32.mrb[0].mxu0
    %v136 = vadd.f32 %v64, %v135
    %v137 = vpop.f32.mrb[0].mxu0
    %138 = vdwg.mxu0
    %v139 = vmax.f32 %v136, 0.0
    %v140 = vld [vmem:[#allocation7] sm:$0xff]
    %v141 = vld [vmem:[#allocation7 + $0x8] sm:$0xff]
    %v142 = vld [vmem:[#allocation7 + $0x10] sm:$0xff]
    %v143 = vld [vmem:[#allocation7 + $0x18] sm:$0xff]
    %v144 = vld [vmem:[#allocation7 + $0x20] sm:$0xff]
    %v145 = vld [vmem:[#allocation7 + $0x28] sm:$0xff]
    %v146 = vld [vmem:[#allocation7 + $0x30] sm:$0xff]
    %v147 = vld [vmem:[#allocation7 + $0x38] sm:$0xff]
    %v148 = vld [vmem:[#allocation7 + $0x40] sm:$0xff]
    %v149 = vld [vmem:[#allocation7 + $0x48] sm:$0xff]
    %v150 = vld [vmem:[#allocation7 + $0x50] sm:$0xff]
    %v151 = vld [vmem:[#allocation7 + $0x58] sm:$0xff]
    %v152 = vld [vmem:[#allocation7 + $0x60] sm:$0xff]
    %v153 = vld [vmem:[#allocation7 + $0x68] sm:$0xff]
    %v154 = vld [vmem:[#allocation7 + $0x70] sm:$0xff]
    %v155 = vld [vmem:[#allocation7 + $0x78] sm:$0xff]
    %v156 = vld [vmem:[%s3 + $0x1] sm:$0x1]
    %v157 = vlaneseq
    %v158 = vshrl.u32 %v157, 7
    %v159 = vsub.s32 0, %v158
    %v160 = vrot.slane %v156, %v159
    %161 = vmatprep.subr.mxu0 0.0
    %162 = vmatpush1.msra.mxu0 %v140
    %163 = vmatprep.subr.mxu0 0.0
    %164 = vmatpush1.msra.mxu0 %v141
    %165 = vmatprep.subr.mxu0 0.0
    %166 = vmatpush1.msra.mxu0 %v142
    %167 = vmatprep.subr.mxu0 0.0
    %168 = vmatpush1.msra.mxu0 %v143
    %169 = vmatprep.subr.mxu0 0.0
    %170 = vmatpush1.msra.mxu0 %v144
    %171 = vmatprep.subr.mxu0 0.0
    %172 = vmatpush1.msra.mxu0 %v145
    %173 = vmatprep.subr.mxu0 0.0
    %174 = vmatpush1.msra.mxu0 %v146
    %175 = vmatprep.subr.mxu0 0.0
    %176 = vmatpush1.msra.mxu0 %v147
    %177 = vmatprep.subr.mxu0 0.0
    %178 = vmatpush1.msra.mxu0 %v148
    %179 = vmatprep.subr.mxu0 0.0
    %180 = vmatpush1.msra.mxu0 %v149
    %181 = vmatprep.subr.mxu0 0.0
    %182 = vmatpush1.msra.mxu0 %v150
    %183 = vmatprep.subr.mxu0 0.0
    %184 = vmatpush1.msra.mxu0 %v151
    %185 = vmatprep.subr.mxu0 0.0
    %186 = vmatpush1.msra.mxu0 %v152
    %187 = vmatprep.subr.mxu0 0.0
    %188 = vmatpush1.msra.mxu0 %v153
    %189 = vmatprep.subr.mxu0 0.0
    %190 = vmatpush1.msra.mxu0 %v154
    %191 = vmatprep.subr.mxu0 0.0
    %192 = vmatpush1.msra.mxu0 %v155
    %193 = vmatprep.subr.mxu0 0.0
    %194 = vmatpush1.msra.mxu0 0.0
    %195 = vmatprep.subr.mxu0 0.0
    %196 = vmatpush1.msra.mxu0 0.0
    %197 = vmatprep.subr.mxu0 0.0
    %198 = vmatpush1.msra.mxu0 0.0
    %199 = vmatprep.subr.mxu0 0.0
    %200 = vmatpush1.msra.mxu0 0.0
    %201 = vmatprep.subr.mxu0 0.0
    %202 = vmatpush1.msra.mxu0 0.0
    %203 = vmatprep.subr.mxu0 0.0
    %204 = vmatpush1.msra.mxu0 0.0
    %205 = vmatprep.subr.mxu0 0.0
    %206 = vmatpush1.msra.mxu0 0.0
    %207 = vmatprep.subr.mxu0 0.0
    %208 = vmatpush1.msra.mxu0 0.0
    %209 = vmatprep.subr.mxu0 0.0
    %210 = vmatpush1.msra.mxu0 0.0
    %211 = vmatprep.subr.mxu0 0.0
    %212 = vmatpush1.msra.mxu0 0.0
    %213 = vmatprep.subr.mxu0 0.0
    %214 = vmatpush1.msra.mxu0 0.0
    %215 = vmatprep.subr.mxu0 0.0
    %216 = vmatpush1.msra.mxu0 0.0
    %217 = vmatprep.subr.mxu0 0.0
    %218 = vmatpush1.msra.mxu0 0.0
    %219 = vmatprep.subr.mxu0 0.0
    %220 = vmatpush1.msra.mxu0 0.0
    %221 = vmatprep.subr.mxu0 0.0
    %222 = vmatpush1.msra.mxu0 0.0
    %223 = vmatprep.subr.mxu0 0.0
    %224 = vmatpush1.msra.mxu0 0.0
    %225 = vmatprep.mubr.f32.mxu0 0.0
    %226 = vmatmul.mubr.f32.gmra.mrb[0].mxu0 %v139
    %v227 = vpop.f32.mrb[0].mxu0
    %v228 = vadd.f32 %v160, %v227
    %v229 = vpop.f32.mrb[0].mxu0
    %230 = vdwg.mxu0
    %231 = vst [vmem:[#allocation8] sm:$0xff] %v228
    // Predicated region
    $region30: #{tpu_custom_call.1} parent=1 // pred_check
      _
    $region31: #{tpu_custom_call.1} parent=1 // pred_check_branch
      %233 = sbr.rel (0) target = $region33
    $region32: #{tpu_custom_call.1} parent=1 // pred_region
      %s235 = ssub.s32 128, 128
      %236 = vsyncadd [#allocation4], %s235
      %s238 = sshll.u32 [#allocation8], 4
      %s239 = int_to_ptr.vmem [resolvable:$true] %s238
      %241 = dma.vmem_to_hbm [thread:$0]  %s239, 128, %s4, [#allocation4]
    $region33: #{tpu_custom_call.1} parent=1 // pred_fallthru
      _
    // Predicated region
    $region34: #{tpu_custom_call.1} parent=1 // pred_check
      _
    $region35: #{tpu_custom_call.1} parent=1 // pred_check_branch
      %243 = sbr.rel (0) target = $region37
    $region36: #{tpu_custom_call.1} parent=1 // pred_region
      %244 = dma.done [#allocation4], 128
    $region37: #{tpu_custom_call.1} parent=1 // pred_fallthru
      _
    %245 = vsyncpa [#allocation3], 1
    %246 = vsyncpa [#allocation6], 1
    %247 = vsyncpa [#allocation4], 1

</llo_original>
